<compile_context>
chip_gen: v7x
topology: tpu7x:2x2x1
jax: 0.10.0
libtpu: 0.0.40
codegen_flags: <defaults>
</compile_context>

<pallas_src>
import functools

import jax
import jax.numpy as jnp
from jax.experimental import pallas as pl
from jax.experimental.pallas import tpu as pltpu

LANES = 128
MAX_BLOCK_ROWS = 8192   # 8192 x 128 x 4 B = 4 MiB per f32 input block


def _tensorcores_per_chip():
    # The 2-way leading-axis split only pays off on dual-TensorCore chips
    # (v7x).  On single-TC v5e/v6e it just doubles grid steps.
    try:
        kind = jax.devices()[0].device_kind.lower()
    except Exception:
        return 1
    return 2 if "v7" in kind else 1


def _bce_sum_kernel(x_ref, t_ref, acc_ref, *, pos_weight, block_rows, acc_rows):
    i = pl.program_id(1)

    @pl.when(i == 0)
    def _():
        acc_ref[...] = jnp.zeros_like(acc_ref)

    x = x_ref[...].astype(jnp.float32)
    t = t_ref[...].astype(jnp.float32)

    # Stable BCE-with-logits:
    #   -pw*t*log(sigmoid(x)) - (1-t)*log(1-sigmoid(x))
    # = (1-t)*x + (1 + (pw-1)*t) * softplus(-x)
    sp = jnp.maximum(-x, 0.0) + jnp.log(1.0 + jnp.exp(-jnp.abs(x)))
    if pos_weight == 1.0:           # trace-time fold of the common case
        loss = (1.0 - t) * x + sp
    else:
        loss = (1.0 - t) * x + (1.0 + (pos_weight - 1.0) * t) * sp

    # Pure VPU adds into an (acc_rows, 128) resident accumulator; the single
    # cross-lane reduce to a scalar happens once, outside the kernel.
    acc_ref[...] += loss.reshape(block_rows // acc_rows, acc_rows, LANES).sum(axis=0)


def _stable_bce(x, t, pos_weight):
    # Same math as the kernel, for the (short) ragged tail in plain jnp.
    x = x.astype(jnp.float32)
    t = t.astype(jnp.float32)
    sp = jnp.maximum(-x, 0.0) + jnp.log(1.0 + jnp.exp(-jnp.abs(x)))
    return (1.0 - t) * x + (1.0 + (pos_weight - 1.0) * t) * sp


def bce_with_logits_loss(logits, target, pos_weight=1.0, reduction="mean",
                         max_block_rows=MAX_BLOCK_ROWS):
    """Pallas implementation of BCELosswithLogits.forward."""
    if reduction not in ("mean", "sum"):
        # TODO(synk): reduction='none' (elementwise loss tensor) not implemented.
        raise NotImplementedError("only 'mean' and 'sum' reductions supported")
    # TODO(synk): pos_weight is a compile-time scalar; per-class tensor
    # broadcast (as torch allows) would need an extra kernel input.

    pos_weight = float(pos_weight)
    n = logits.size
    flat_l = logits.reshape(-1)
    flat_t = target.reshape(-1)

    ncores = _tensorcores_per_chip()
    rows_total = n // LANES

    # Block-aligned prefix handled by the kernel; tail handled in the wrapper.
    rows_main = 0
    block_rows = 0
    blocks_per_core = 0
    if rows_total >= 8 * ncores:
        per_core = rows_total // ncores
        block_rows = min(max_block_rows, (per_core // 8) * 8)
        if block_rows >= 64:               # prefer a (64,128) accumulator
            block_rows -= block_rows % 64
        blocks_per_core = per_core // block_rows
        rows_main = ncores * blocks_per_core * block_rows
    n_main = rows_main * LANES

    total = jnp.float32(0.0)

    if rows_main > 0:
        acc_rows = 64 if block_rows % 64 == 0 else 8
        l2 = flat_l[:n_main].reshape(rows_main, LANES)
        t2 = flat_t[:n_main].reshape(rows_main, LANES)

        in_spec = pl.BlockSpec(
            (block_rows, LANES),
            lambda c, i, bpc=blocks_per_core: (c * bpc + i, 0))

        if ncores > 1:
            dim_sem = (getattr(pltpu, "CORE_PARALLEL", "parallel"), "arbitrary")
        else:
            dim_sem = ("arbitrary", "arbitrary")

        # Double-buffered inputs + headroom for in-kernel f32 temporaries.
        vmem_limit = 2 * block_rows * LANES * (l2.dtype.itemsize
                                               + t2.dtype.itemsize)
        vmem_limit += 3 * block_rows * LANES * 4
        vmem_limit = int(min(max(vmem_limit + (4 << 20), 16 << 20), 100 << 20))

        cost = pl.CostEstimate(
            flops=9 * n_main,
            transcendentals=2 * n_main,
            bytes_accessed=n_main * (l2.dtype.itemsize + t2.dtype.itemsize)
            + ncores * acc_rows * LANES * 4)

        partials = pl.pallas_call(
            functools.partial(_bce_sum_kernel, pos_weight=pos_weight,
                              block_rows=block_rows, acc_rows=acc_rows),
            out_shape=jax.ShapeDtypeStruct((ncores, acc_rows, LANES),
                                           jnp.float32),
            grid_spec=pltpu.PrefetchScalarGridSpec(
                num_scalar_prefetch=0,
                grid=(ncores, blocks_per_core),
                in_specs=[in_spec, in_spec],
                out_specs=pl.BlockSpec((None, acc_rows, LANES),
                                       lambda c, i: (c, 0, 0)),
            ),
            compiler_params=pltpu.CompilerParams(
                dimension_semantics=dim_sem,
                vmem_limit_bytes=vmem_limit),
            cost_estimate=cost,
        )(l2, t2)
        total = total + jnp.sum(partials)

    if n_main < n:
        total = total + jnp.sum(
            _stable_bce(flat_l[n_main:], flat_t[n_main:], pos_weight))

    if reduction == "mean":
        return total / jnp.float32(n)
    return total


def _reference(logits, target, pos_weight=1.0, reduction="mean"):
    # Direct mirror of the PyTorch module (naive sigmoid -> log form).
    p = jax.nn.sigmoid(logits.astype(jnp.float32))
    t = target.astype(jnp.float32)
    loss = -pos_weight * t * jnp.log(p) - (1.0 - t) * jnp.log(1.0 - p)
    if reduction == "mean":
        return loss.mean()
    return loss.sum()


if __name__ == "__main__":
    key = jax.random.PRNGKey(0)
    k1, k2, k3, k4, k5, k6, k7, k8 = jax.random.split(key, 8)

    # NCHW synthetic inputs: batch=2, channels=4, spatial=16x16 -> 2048 elems
    # (exactly 16 lane-dense rows, no tail): single-block kernel path, 'mean'.
    logits = jax.random.normal(k1, (2, 4, 16, 16), dtype=jnp.float32)
    target = (jax.random.uniform(k2, (2, 4, 16, 16)) > 0.5).astype(jnp.float32)
    out = bce_with_logits_loss(logits, target, pos_weight=1.0, reduction="mean")
    out = jax.block_until_ready(out)
    ref = _reference(logits, target, 1.0, "mean")
    assert jnp.allclose(out, ref, rtol=1e-4, atol=1e-6), (out, ref)

    # Multi-block accumulation + wide (64,128) accumulator + pos_weight + 'sum'
    # (max_block_rows=64 forces 4 grid steps along the reduction axis).
    logits2 = jax.random.normal(k3, (2, 4, 64, 64), dtype=jnp.float32)
    target2 = (jax.random.uniform(k4, (2, 4, 64, 64)) > 0.5).astype(jnp.float32)
    out2 = bce_with_logits_loss(logits2, target2, pos_weight=2.0,
                                reduction="sum", max_block_rows=64)
    out2 = jax.block_until_ready(out2)
    ref2 = _reference(logits2, target2, 2.0, "sum")
    assert jnp.allclose(out2, ref2, rtol=1e-4, atol=1e-3), (out2, ref2)

    # Mixed path: kernel on the aligned prefix + plain-jnp ragged tail.
    logits3 = jax.random.normal(k5, (2, 4, 16, 17), dtype=jnp.float32)
    target3 = (jax.random.uniform(k6, (2, 4, 16, 17)) > 0.5).astype(jnp.float32)
    out3 = bce_with_logits_loss(logits3, target3, pos_weight=1.5,
                                reduction="mean")
    out3 = jax.block_until_ready(out3)
    ref3 = _reference(logits3, target3, 1.5, "mean")
    assert jnp.allclose(out3, ref3, rtol=1e-4, atol=1e-5), (out3, ref3)

    # Tiny ragged shape: entirely handled by the wrapper tail path.
    logits4 = jax.random.normal(k7, (2, 3, 7, 5), dtype=jnp.float32)
    target4 = (jax.random.uniform(k8, (2, 3, 7, 5)) > 0.5).astype(jnp.float32)
    out4 = bce_with_logits_loss(logits4, target4, pos_weight=2.0,
                                reduction="sum")
    out4 = jax.block_until_ready(out4)
    ref4 = _reference(logits4, target4, 2.0, "sum")
    assert jnp.allclose(out4, ref4, rtol=1e-4, atol=1e-5), (out4, ref4)

    print("KERNEL_OK")
</pallas_src>

<mosaic_0001>
module attributes {stable_mosaic.version = 11 : i64} {
  func.func @_bce_sum_kernel(%arg0: i32, %arg1: i32, %arg2: memref<16x128xf32, #tpu.memory_space<vmem>>, %arg3: memref<16x128xf32, #tpu.memory_space<vmem>>, %arg4: memref<1x8x128xf32, #tpu.memory_space<vmem>>) attributes {dimension_semantics = [#tpu.dimension_semantics<arbitrary>, #tpu.dimension_semantics<arbitrary>], iteration_bounds = array<i64: 1, 1>, scalar_prefetch = 0 : i64, scratch_operands = 0 : i64, tpu.core_type = #tpu.core_type<tc>, window_params = [{transform_indices = @transform_0, window_bounds = array<i64: 16, 128>}, {transform_indices = @transform_1, window_bounds = array<i64: 16, 128>}, {transform_indices = @transform_2, window_bounds = array<i64: 1, 8, 128>}]} {
    %c0_i32 = arith.constant 0 : i32
    %0 = arith.cmpi eq, %arg1, %c0_i32 : i32
    %1 = arith.extui %0 : i1 to i32
    %c0_i32_0 = arith.constant 0 : i32
    %2 = arith.cmpi ne, %1, %c0_i32_0 : i32
    scf.if %2 {
      %cst_15 = arith.constant 0.000000e+00 : f32
      %29 = vector.broadcast %cst_15 : f32 to vector<8x128xf32>
      %c0_16 = arith.constant 0 : index
      %c0_17 = arith.constant 0 : index
      %c0_18 = arith.constant 0 : index
      %30 = vector.load %arg4[%c0_16, %c0_17, %c0_18] : memref<1x8x128xf32, #tpu.memory_space<vmem>>, vector<1x8x128xf32>
      %31 = vector.shape_cast %30 : vector<1x8x128xf32> to vector<8x128xf32>
      %32 = vector.shape_cast %29 : vector<8x128xf32> to vector<1x8x128xf32>
      tpu.vector_store %arg4[%c0_16, %c0_17, %c0_18], %32 {strides = array<i32>} : memref<1x8x128xf32, #tpu.memory_space<vmem>>, vector<1x8x128xf32>,
    } else {
    }
    %c0 = arith.constant 0 : index
    %c0_1 = arith.constant 0 : index
    %3 = vector.load %arg2[%c0, %c0_1] : memref<16x128xf32, #tpu.memory_space<vmem>>, vector<16x128xf32>
    %c0_2 = arith.constant 0 : index
    %c0_3 = arith.constant 0 : index
    %4 = vector.load %arg3[%c0_2, %c0_3] : memref<16x128xf32, #tpu.memory_space<vmem>>, vector<16x128xf32>
    %cst = arith.constant 0.000000e+00 : f32
    %5 = vector.broadcast %cst : f32 to vector<16x128xf32>
    %6 = arith.subf %5, %3 : vector<16x128xf32>
    %cst_4 = arith.constant 0.000000e+00 : f32
    %7 = vector.broadcast %cst_4 : f32 to vector<16x128xf32>
    %8 = arith.maximumf %6, %7 : vector<16x128xf32>
    %9 = math.absf %3 : vector<16x128xf32>
    %cst_5 = arith.constant 0.000000e+00 : f32
    %10 = vector.broadcast %cst_5 : f32 to vector<16x128xf32>
    %11 = arith.subf %10, %9 : vector<16x128xf32>
    %12 = math.exp %11 : vector<16x128xf32>
    %cst_6 = arith.constant 1.000000e+00 : f32
    %13 = vector.broadcast %cst_6 : f32 to vector<16x128xf32>
    %14 = arith.addf %13, %12 : vector<16x128xf32>
    %15 = math.log %14 : vector<16x128xf32>
    %16 = arith.addf %8, %15 : vector<16x128xf32>
    %cst_7 = arith.constant 1.000000e+00 : f32
    %17 = vector.broadcast %cst_7 : f32 to vector<16x128xf32>
    %18 = arith.subf %17, %4 : vector<16x128xf32>
    %19 = arith.mulf %18, %3 : vector<16x128xf32>
    %20 = arith.addf %19, %16 : vector<16x128xf32>
    %c0_8 = arith.constant 0 : index
    %c0_9 = arith.constant 0 : index
    %c0_10 = arith.constant 0 : index
    %21 = vector.load %arg4[%c0_8, %c0_9, %c0_10] : memref<1x8x128xf32, #tpu.memory_space<vmem>>, vector<1x8x128xf32>
    %22 = vector.shape_cast %21 : vector<1x8x128xf32> to vector<8x128xf32>
    %23 = vector.shape_cast %20 : vector<16x128xf32> to vector<2x8x128xf32>
    %cst_11 = arith.constant dense<0.000000e+00> : vector<8x128xf32>
    %24 = vector.multi_reduction <add>, %23, %cst_11 [0] : vector<2x8x128xf32> to vector<8x128xf32>
    %25 = arith.addf %22, %24 : vector<8x128xf32>
    %c0_12 = arith.constant 0 : index
    %c0_13 = arith.constant 0 : index
    %c0_14 = arith.constant 0 : index
    %26 = vector.load %arg4[%c0_12, %c0_13, %c0_14] : memref<1x8x128xf32, #tpu.memory_space<vmem>>, vector<1x8x128xf32>
    %27 = vector.shape_cast %26 : vector<1x8x128xf32> to vector<8x128xf32>
    %28 = vector.shape_cast %25 : vector<8x128xf32> to vector<1x8x128xf32>
    tpu.vector_store %arg4[%c0_12, %c0_13, %c0_14], %28 {strides = array<i32>} : memref<1x8x128xf32, #tpu.memory_space<vmem>>, vector<1x8x128xf32>,
    return
  }
  func.func @transform_0(%arg0: i32, %arg1: i32) -> (i32, i32) {
    %c1_i32 = arith.constant 1 : i32
    %0 = arith.muli %arg0, %c1_i32 : i32
    %1 = arith.addi %0, %arg1 : i32
    %c0_i32 = arith.constant 0 : i32
    %c0_i32_0 = arith.constant 0 : i32
    return %1, %c0_i32 : i32, i32
  }
  func.func @transform_1(%arg0: i32, %arg1: i32) -> (i32, i32) {
    %c1_i32 = arith.constant 1 : i32
    %0 = arith.muli %arg0, %c1_i32 : i32
    %1 = arith.addi %0, %arg1 : i32
    %c0_i32 = arith.constant 0 : i32
    %c0_i32_0 = arith.constant 0 : i32
    return %1, %c0_i32 : i32, i32
  }
  func.func @transform_2(%arg0: i32, %arg1: i32) -> (i32, i32, i32) {
    %c0_i32 = arith.constant 0 : i32
    %c0_i32_0 = arith.constant 0 : i32
    %c0_i32_1 = arith.constant 0 : i32
    return %arg0, %c0_i32, %c0_i32_0 : i32, i32, i32
  }
}

</mosaic_0001>

<llo_original>
// kernel: tpu_custom_call.1
$region0: #{tpu_custom_call.1}
  #allocation0 [shape = 'u32[]', space=smem, size = 0x4, offset = 0x4, fixed_abs, tag = 'smem constant byte address 0x4 - core index']
  #allocation1 [shape = 'u32[144,128]{1,0:T(1,128)}', space=vmem, size = 0x12000, scoped, tag = 'internal scratch']
  %s0 = inlined_call_operand.hbm [shape: f32[16,128], index: 0, kind: input, shape index: {}]
  %s1 = inlined_call_operand.hbm [shape: f32[16,128], index: 1, kind: input, shape index: {}]
  %s2 = inlined_call_operand.hbm [shape: f32[1,8,128], index: 2, kind: output, shape index: {}]
  %s3 = sld [smem:[#allocation0]]
  $region30: #{tpu_custom_call.1} parent=0
    _
  %s5 = ssub.s32 1, %s3
  %s6 = scalar_select 0, %s5, %s3
  $region1: #{tpu_custom_call.1} parent=0
    #allocation2 [shape = 'u8[8192]{0}', space=vmem, size = 0x2000, scoped, tag = 'input window, operand 0, single buffered']
    #allocation3 [shape = 's32[1]{0}', space=sflag, size = 0x4, scoped, tag = 'scoped memory for tpu_custom_call.1']
    #allocation4 [shape = 's32[1]{0}', space=sflag, size = 0x4, scoped, tag = 'scoped memory for tpu_custom_call.1']
    #allocation5 [shape = 'u8[8192]{0}', space=vmem, size = 0x2000, scoped, tag = 'input window, operand 1, single buffered']
    #allocation6 [shape = 's32[1]{0}', space=sflag, size = 0x4, scoped, tag = 'scoped memory for tpu_custom_call.1']
    #allocation7 [shape = 'u8[4096]{0}', space=vmem, size = 0x1000, scoped, tag = 'output window, operand 0, single buffered']
    %7 = vsyncpa [#allocation3], 0
    %8 = vsyncpa [#allocation6], 0
    %9 = vsyncpa [#allocation4], 0
    // Predicated region
    $region2: #{tpu_custom_call.1} parent=1 // pred_check
      _
    $region3: #{tpu_custom_call.1} parent=1 // pred_check_branch
      %11 = sbr.rel (0) target = $region5
    $region4: #{tpu_custom_call.1} parent=1 // pred_region
      %s12 = sadd.s32 0, 0
      %s13 = smul.u32 2, %s12
      %s15 = ssub.s32 256, 256
      %16 = vsyncadd [#allocation3], %s15
      %s17 = smul.addr %s13, 128
      %s18 = scalar_lea.hbm %s0, %s17
      %s19 = sshll.u32 [#allocation2], 4
      %s20 = int_to_ptr.vmem [resolvable:$true] %s19
      %25 = dma.hbm_to_vmem [thread:$0]  %s18, 256, %s20, [#allocation3], 128, 128, 8
    $region5: #{tpu_custom_call.1} parent=1 // pred_fallthru
      _
    // Predicated region
    $region6: #{tpu_custom_call.1} parent=1 // pred_check
      _
    $region7: #{tpu_custom_call.1} parent=1 // pred_check_branch
      %27 = sbr.rel (0) target = $region9
    $region8: #{tpu_custom_call.1} parent=1 // pred_region
      %s28 = sadd.s32 0, 0
      %s29 = smul.u32 2, %s28
      %s31 = ssub.s32 256, 256
      %32 = vsyncadd [#allocation6], %s31
      %s33 = smul.addr %s29, 128
      %s34 = scalar_lea.hbm %s1, %s33
      %s35 = sshll.u32 [#allocation5], 4
      %s36 = int_to_ptr.vmem [resolvable:$true] %s35
      %41 = dma.hbm_to_vmem [thread:$0]  %s34, 256, %s36, [#allocation6], 128, 128, 8
    $region9: #{tpu_custom_call.1} parent=1 // pred_fallthru
      _
    // Predicated region
    $region10: #{tpu_custom_call.1} parent=1 // pred_check
      _
    $region11: #{tpu_custom_call.1} parent=1 // pred_check_branch
      %43 = sbr.rel (0) target = $region13
    $region12: #{tpu_custom_call.1} parent=1 // pred_region
      %44 = dma.done [#allocation3], 256
    $region13: #{tpu_custom_call.1} parent=1 // pred_fallthru
      _
    // Predicated region
    $region14: #{tpu_custom_call.1} parent=1 // pred_check
      _
    $region15: #{tpu_custom_call.1} parent=1 // pred_check_branch
      %46 = sbr.rel (0) target = $region17
    $region16: #{tpu_custom_call.1} parent=1 // pred_region
      %47 = dma.done [#allocation6], 256
    $region17: #{tpu_custom_call.1} parent=1 // pred_fallthru
      _
    %s48 = sadd.s32 0, 0
    %s49 = smul.u32 2, %s48
    %s50 = sadd.s32 0, 0
    %s51 = smul.u32 2, %s50
    %p52 = scmp.eq.s32.totalorder 0, 0
    // Predicated region
    $region18: #{tpu_custom_call.1} parent=1 // pred_check
      %p53 = pneg %p52
    $region19: #{tpu_custom_call.1} parent=1 // pred_check_branch
      %55 = sbr.rel (%p53) target = $region21
    $region20: #{tpu_custom_call.1} parent=1 // pred_region
      %56 = vst [vmem:[#allocation7] sm:$0xff] 0.0
    $region21: #{tpu_custom_call.1} parent=1 // pred_fallthru
      _
    %v57 = vld [vmem:[#allocation2] sm:$0xff]
    %v58 = vld [vmem:[#allocation2 + $0x8] sm:$0xff]
    %v59 = vld [vmem:[#allocation5] sm:$0xff]
    %v60 = vld [vmem:[#allocation5 + $0x8] sm:$0xff]
    %v61 = vsub.f32 0.0, %v57
    %v62 = vsub.f32 0.0, %v58
    %v63 = vmax.f32 %v61, 0.0
    %v64 = vmax.f32 %v62, 0.0
    %v65 = vand.u32 2147483647, %v57
    %v66 = vand.u32 2147483647, %v58
    %v67 = vsub.f32 0.0, %v65
    %v68 = vsub.f32 0.0, %v66
    %v69 = vmul.f32 %v67, 1.442695
    %v70 = vpow.pop %v69
    %v71 = vmul.f32 %v68, 1.442695
    %v72 = vpow.pop %v71
    %v73 = vadd.f32 %v70, 1.0
    %v74 = vadd.f32 %v72, 1.0
    %v75 = vlog2.pop %v73
    %v76 = vmul.f32 %v75, 0.6931472
    %v77 = vlog2.pop %v74
    %v78 = vmul.f32 %v77, 0.6931472
    %v79 = vadd.f32 %v63, %v76
    %v80 = vadd.f32 %v64, %v78
    %v81 = vsub.f32 1.0, %v59
    %v82 = vsub.f32 1.0, %v60
    %v83 = vmul.f32 %v81, %v57
    %v84 = vmul.f32 %v82, %v58
    %v85 = vadd.f32 %v83, %v79
    %v86 = vadd.f32 %v84, %v80
    %v87 = vld [vmem:[#allocation7] sm:$0xff]
    %v88 = vadd.f32 %v85, %v86
    %v89 = vadd.f32 %v87, %v88
    %90 = vst [vmem:[#allocation7] sm:$0xff] %v89
    // Predicated region
    $region22: #{tpu_custom_call.1} parent=1 // pred_check
      _
    $region23: #{tpu_custom_call.1} parent=1 // pred_check_branch
      %92 = sbr.rel (0) target = $region25
    $region24: #{tpu_custom_call.1} parent=1 // pred_region
      %s94 = ssub.s32 128, 128
      %95 = vsyncadd [#allocation4], %s94
      %s97 = sshll.u32 [#allocation7], 4
      %s98 = int_to_ptr.vmem [resolvable:$true] %s97
      %100 = dma.vmem_to_hbm [thread:$0]  %s98, 128, %s2, [#allocation4]
    $region25: #{tpu_custom_call.1} parent=1 // pred_fallthru
      _
    // Predicated region
    $region26: #{tpu_custom_call.1} parent=1 // pred_check
      _
    $region27: #{tpu_custom_call.1} parent=1 // pred_check_branch
      %102 = sbr.rel (0) target = $region29
    $region28: #{tpu_custom_call.1} parent=1 // pred_region
      %103 = dma.done [#allocation4], 128
    $region29: #{tpu_custom_call.1} parent=1 // pred_fallthru
      _
    %104 = vsyncpa [#allocation3], 1
    %105 = vsyncpa [#allocation6], 1
    %106 = vsyncpa [#allocation4], 1

</llo_original>
